<compile_context>
chip_gen: v7x
topology: tpu7x:2x2x1
jax: 0.10.0
libtpu: 0.0.40
codegen_flags: <defaults>
</compile_context>

<pallas_src>
import functools

import numpy as np

import jax
import jax.numpy as jnp
from jax.experimental import pallas as pl
from jax.experimental.pallas import tpu as pltpu

# --- model hyperparameters (mirroring bigram.py) ---
block_size = 8
n_embed = 32
num_heads = 4
head_size = n_embed // num_heads      # 8
vocab_size = 8                        # must equal block_size (see NOTE above)
V_PAD = 128                           # lane-dense padded width


def _bigram_fused_kernel(idx_ref, emb_ref, wkqv_ref, wlm_ref, blm_ref,
                         hmask_ref, amask_ref, o_ref):
    """Single-invocation fused forward for all N = B*T tokens.

    idx_ref   : (N, 1) int32        flattened token ids
    emb_ref   : (vocab_size, C)     pre-summed token+position embedding table
    wkqv_ref  : (C, 3*V_PAD)        [Wk^T | Wq^T | Wv^T], each padded to 128 lanes
    wlm_ref   : (V_PAD, V_PAD)      lm_head weight^T, zero-padded
    blm_ref   : (1, V_PAD)          lm_head bias, zero-padded
    hmask_ref : (4N, V_PAD)         row h*N+i -> 1.0 on head h's 8 lanes, else 0
    amask_ref : (4N, N)             additive causal mask (0 keep / -1e30 drop),
                                    block-diagonal per batch, tiled over heads
    o_ref     : (N, V_PAD)          logits (lane-dense, padded)
    """
    N = o_ref.shape[0]

    # ---- fused embedding lookup: one-hot(ids) @ (tok_table + pos_table) ----
    ids = idx_ref[...]                                               # (N, 1)
    vocab_iota = jax.lax.broadcasted_iota(jnp.int32, (N, vocab_size), 1)
    onehot = (ids == vocab_iota).astype(jnp.float32)                 # (N, V)
    x = jnp.dot(onehot, emb_ref[...], preferred_element_type=jnp.float32)  # (N, C)

    # ---- single packed K/Q/V projection; 128-lane-aligned free slices ----
    kqv = jnp.dot(x, wkqv_ref[...], preferred_element_type=jnp.float32)    # (N, 384)
    k = kqv[:, 0 * V_PAD:1 * V_PAD]                                  # (N, 128)
    q = kqv[:, 1 * V_PAD:2 * V_PAD]                                  # (N, 128)
    v = kqv[:, 2 * V_PAD:3 * V_PAD]                                  # (N, 128)

    hm = hmask_ref[...]                                              # (4N, 128)
    # Stack all heads along the sublane axis (vreg copies) + one VPU mask mul.
    k_stack = jnp.concatenate([k, k, k, k], axis=0) * hm             # (4N, 128)
    v_stack = jnp.concatenate([v, v, v, v], axis=0) * hm             # (4N, 128)

    # ---- ONE stacked score matmul for all heads ----
    # The mask sits on the contraction dim, so (k*m_h) . q == k_h @ q_h^T.
    # NOTE: the reference computes k @ q^T (NOT q @ k^T) -- keep it that way.
    scale = jnp.float32(1.0 / (n_embed ** 0.5))                      # C ** -0.5
    s = jax.lax.dot_general(k_stack, q,
                            dimension_numbers=(((1,), (1,)), ((), ())),
                            preferred_element_type=jnp.float32)      # (4N, N)
    s = s * scale + amask_ref[...]                                   # causal + batch mask

    # ---- ONE numerically-stable masked softmax over the last dim ----
    # (exact reciprocal + max-subtract kept to hold the 1e-4 tolerance)
    s = s - jnp.max(s, axis=-1, keepdims=True)
    p = jnp.exp(s)
    denom = jnp.sum(p, axis=-1, keepdims=True)
    p = p * pl.reciprocal(denom, approx=False)                       # (4N, N)

    # ---- PV: 4 dots on sublane-aligned slices; heads land in disjoint lane
    # slabs of attn, so the accumulation reproduces the head concatenation ----
    attn = jnp.zeros((N, V_PAD), dtype=jnp.float32)
    for h in range(num_heads):                                       # unrolled, 4 iters
        attn = attn + jnp.dot(p[h * N:(h + 1) * N, :],
                              v_stack[h * N:(h + 1) * N, :],
                              preferred_element_type=jnp.float32)

    # ---- single lane-dense lm_head matmul; padded lanes stay exactly zero ----
    logits = jnp.dot(attn, wlm_ref[...], preferred_element_type=jnp.float32)
    o_ref[...] = logits + blm_ref[...]


def prepare_params(params, batch_size, seq_len):
    """One-time (hoisted out of the per-call hot path) weight/mask prep."""
    assert params["tok_table"].shape == params["pos_table"].shape, (
        "pre-summed embedding requires vocab_size == block_size "
        "(the reference indexes the position table with token ids)")
    assert seq_len <= block_size
    N = batch_size * seq_len
    C = n_embed

    # pre-summed embedding table (reference adds tok[idx] + pos[idx])
    emb = np.asarray(params["tok_table"], np.float32) + \
        np.asarray(params["pos_table"], np.float32)                  # (V, C)

    # packed, lane-padded projection weights: nn.Linear (out,in) -> (in,out)
    w_kqv = np.zeros((C, 3 * V_PAD), np.float32)
    w_kqv[:, 0 * V_PAD:0 * V_PAD + C] = np.asarray(params["wk"], np.float32).T
    w_kqv[:, 1 * V_PAD:1 * V_PAD + C] = np.asarray(params["wq"], np.float32).T
    w_kqv[:, 2 * V_PAD:2 * V_PAD + C] = np.asarray(params["wv"], np.float32).T

    # lane-padded lm_head
    w_lm = np.zeros((V_PAD, V_PAD), np.float32)
    w_lm[:C, :vocab_size] = np.asarray(params["w_lm"], np.float32).T
    b_lm = np.zeros((1, V_PAD), np.float32)
    b_lm[0, :vocab_size] = np.asarray(params["b_lm"], np.float32)

    # per-head lane-mask stack: row h*N+i selects head h's 8-lane slab
    hmask = np.zeros((num_heads * N, V_PAD), np.float32)
    for h in range(num_heads):
        hmask[h * N:(h + 1) * N, h * head_size:(h + 1) * head_size] = 1.0

    # block-diagonal-per-batch causal additive mask, tiled over the head stack
    t = np.arange(N) % seq_len
    b = np.arange(N) // seq_len
    keep = (b[:, None] == b[None, :]) & (t[None, :] <= t[:, None])   # (N, N)
    amask = np.where(np.tile(keep, (num_heads, 1)), 0.0, -1e30).astype(np.float32)

    return {
        "emb_table": jnp.asarray(emb),
        "w_kqv": jnp.asarray(w_kqv),
        "w_lm": jnp.asarray(w_lm),
        "b_lm": jnp.asarray(b_lm),
        "head_mask": jnp.asarray(hmask),
        "mask_add": jnp.asarray(amask),
    }


def bigram_forward(idx, prep):
    """idx: (B, T) int32 -> (logits (B, T, vocab_size) float32, loss=None)."""
    B, T = idx.shape
    N = B * T
    assert prep["mask_add"].shape == (num_heads * N, N), (
        "prepared masks were built for a different (batch, seq) shape")

    idx_flat = idx.reshape(N, 1).astype(jnp.int32)

    vmem = pl.BlockSpec(memory_space=pltpu.MemorySpace.VMEM)
    logits_padded = pl.pallas_call(
        _bigram_fused_kernel,
        out_shape=jax.ShapeDtypeStruct((N, V_PAD), jnp.float32),
        in_specs=[vmem] * 7,           # tiny: everything VMEM-resident, no grid
        out_specs=vmem,
    )(idx_flat, prep["emb_table"], prep["w_kqv"], prep["w_lm"], prep["b_lm"],
      prep["head_mask"], prep["mask_add"])

    logits = logits_padded[:, :vocab_size].reshape(B, T, vocab_size)
    # TODO(synk): targets!=None cross-entropy branch not implemented (the
    # exercised reference path is targets=None -> loss=None).
    return logits, None


def _reference_forward(idx, params):
    """Pure-JAX reference mirroring the PyTorch module (targets=None)."""
    tok_emd = params["tok_table"][idx]
    pos_emd = params["pos_table"][idx]          # (sic) indexed by token ids
    x = tok_emd + pos_emd                       # (B, T, C)
    B, T, C = x.shape
    tril = jnp.tril(jnp.ones((block_size, block_size)))[:T, :T]
    outs = []
    for h in range(num_heads):
        sl = slice(h * head_size, (h + 1) * head_size)
        k = x @ params["wk"].T[:, sl]
        q = x @ params["wq"].T[:, sl]
        v = x @ params["wv"].T[:, sl]
        wei = jnp.einsum("btd,bsd->bts", k, q) * (C ** -0.5)
        wei = jnp.where(tril == 0, -jnp.inf, wei)
        wei = jax.nn.softmax(wei, axis=-1)
        outs.append(jnp.einsum("bts,bsd->btd", wei, v))
    attn = jnp.concatenate(outs, axis=-1)
    logits = attn @ params["w_lm"].T + params["b_lm"]
    return logits


def _init_params(key):
    """Deterministic synthetic parameters (PyTorch weight-shape convention)."""
    ks = jax.random.split(key, 8)
    f32 = jnp.float32
    return {
        "tok_table": jax.random.normal(ks[0], (vocab_size, n_embed), f32) * 0.1,
        "pos_table": jax.random.normal(ks[1], (block_size, n_embed), f32) * 0.1,
        # head weights for all 4 heads concatenated: (out=4*head_size, in=n_embed)
        "wk": jax.random.normal(ks[2], (num_heads * head_size, n_embed), f32) * 0.1,
        "wq": jax.random.normal(ks[3], (num_heads * head_size, n_embed), f32) * 0.1,
        "wv": jax.random.normal(ks[4], (num_heads * head_size, n_embed), f32) * 0.1,
        "w_lm": jax.random.normal(ks[5], (vocab_size, n_embed), f32) * 0.1,
        "b_lm": jax.random.normal(ks[6], (vocab_size,), f32) * 0.1,
    }


if __name__ == "__main__":
    key = jax.random.PRNGKey(0)
    pkey, ikey = jax.random.split(key)
    params = _init_params(pkey)

    B, T = 2, block_size
    idx = jax.random.randint(ikey, (B, T), 0, vocab_size, dtype=jnp.int32)

    # one-time preparation (hoisted out of the per-call hot path)
    prep = prepare_params(params, B, T)
    prep = jax.block_until_ready(prep)

    fwd = jax.jit(bigram_forward)
    logits, loss = fwd(idx, prep)
    logits = jax.block_until_ready(logits)

    ref = _reference_forward(idx, params)
    assert logits.shape == (B, T, vocab_size)
    assert loss is None
    assert jnp.allclose(logits, ref, atol=1e-4, rtol=1e-4), "mismatch vs reference"

    print("KERNEL_OK")
</pallas_src>

<mosaic_0001>
module attributes {stable_mosaic.version = 11 : i64} {
  func.func @_bigram_fused_kernel(%arg0: memref<16x1xi32, #tpu.memory_space<vmem>>, %arg1: memref<8x32xf32, #tpu.memory_space<vmem>>, %arg2: memref<32x384xf32, #tpu.memory_space<vmem>>, %arg3: memref<128x128xf32, #tpu.memory_space<vmem>>, %arg4: memref<1x128xf32, #tpu.memory_space<vmem>>, %arg5: memref<64x128xf32, #tpu.memory_space<vmem>>, %arg6: memref<64x16xf32, #tpu.memory_space<vmem>>, %arg7: memref<16x128xf32, #tpu.memory_space<vmem>>) attributes {dimension_semantics = [], scalar_prefetch = 0 : i64, scratch_operands = 0 : i64, tpu.core_type = #tpu.core_type<tc>} {
    %c0 = arith.constant 0 : index
    %c0_0 = arith.constant 0 : index
    %0 = vector.load %arg0[%c0, %c0_0] : memref<16x1xi32, #tpu.memory_space<vmem>>, vector<16x1xi32>
    %1 = tpu.iota {dimensions = array<i32: 1>} : vector<16x8xi32>
    %2 = vector.broadcast %0 : vector<16x1xi32> to vector<16x8xi32>
    %3 = arith.cmpi eq, %2, %1 : vector<16x8xi32>
    %4 = arith.extui %3 : vector<16x8xi1> to vector<16x8xi32>
    %5 = arith.sitofp %4 : vector<16x8xi32> to vector<16x8xf32>
    %c0_1 = arith.constant 0 : index
    %c0_2 = arith.constant 0 : index
    %6 = vector.load %arg1[%c0_1, %c0_2] : memref<8x32xf32, #tpu.memory_space<vmem>>, vector<8x32xf32>
    %cst = arith.constant dense<0.000000e+00> : vector<16x32xf32>
    %7 = tpu.matmul %5, %6, %cst {dimension_numbers = #tpu.dot_dimension_numbers<[1], [0], [0], [1], [0, 0, 1, 1], [], []>} : vector<16x8xf32>, vector<8x32xf32>, vector<16x32xf32> -> vector<16x32xf32>
    %c0_3 = arith.constant 0 : index
    %c0_4 = arith.constant 0 : index
    %8 = vector.load %arg2[%c0_3, %c0_4] : memref<32x384xf32, #tpu.memory_space<vmem>>, vector<32x384xf32>
    %cst_5 = arith.constant dense<0.000000e+00> : vector<16x384xf32>
    %9 = tpu.matmul %7, %8, %cst_5 {dimension_numbers = #tpu.dot_dimension_numbers<[1], [0], [0], [1], [0, 0, 1, 1], [], []>} : vector<16x32xf32>, vector<32x384xf32>, vector<16x384xf32> -> vector<16x384xf32>
    %10 = vector.extract_strided_slice %9 {offsets = [0, 0], sizes = [16, 128], strides = [1, 1]} : vector<16x384xf32> to vector<16x128xf32>
    %11 = vector.extract_strided_slice %9 {offsets = [0, 128], sizes = [16, 128], strides = [1, 1]} : vector<16x384xf32> to vector<16x128xf32>
    %12 = vector.extract_strided_slice %9 {offsets = [0, 256], sizes = [16, 128], strides = [1, 1]} : vector<16x384xf32> to vector<16x128xf32>
    %c0_6 = arith.constant 0 : index
    %c0_7 = arith.constant 0 : index
    %13 = vector.load %arg5[%c0_6, %c0_7] : memref<64x128xf32, #tpu.memory_space<vmem>>, vector<64x128xf32>
    %14 = tpu.concatenate %10, %10, %10, %10 in 0 : vector<16x128xf32>, vector<16x128xf32>, vector<16x128xf32>, vector<16x128xf32> -> vector<64x128xf32>
    %15 = arith.mulf %14, %13 : vector<64x128xf32>
    %16 = tpu.concatenate %12, %12, %12, %12 in 0 : vector<16x128xf32>, vector<16x128xf32>, vector<16x128xf32>, vector<16x128xf32> -> vector<64x128xf32>
    %17 = arith.mulf %16, %13 : vector<64x128xf32>
    %cst_8 = arith.constant dense<0.000000e+00> : vector<64x16xf32>
    %18 = tpu.matmul %15, %11, %cst_8 {dimension_numbers = #tpu.dot_dimension_numbers<[1], [1], [0], [0], [0, 0, 1, 0], [], []>} : vector<64x128xf32>, vector<16x128xf32>, vector<64x16xf32> -> vector<64x16xf32>
    %cst_9 = arith.constant 0.176776692 : f32
    %19 = vector.broadcast %cst_9 : f32 to vector<64x16xf32>
    %20 = arith.mulf %18, %19 : vector<64x16xf32>
    %c0_10 = arith.constant 0 : index
    %c0_11 = arith.constant 0 : index
    %21 = vector.load %arg6[%c0_10, %c0_11] : memref<64x16xf32, #tpu.memory_space<vmem>>, vector<64x16xf32>
    %22 = arith.addf %20, %21 : vector<64x16xf32>
    %cst_12 = arith.constant dense<0xFF800000> : vector<64xf32>
    %23 = vector.multi_reduction <maximumf>, %22, %cst_12 [1] : vector<64x16xf32> to vector<64xf32>
    %24 = vector.shape_cast %23 : vector<64xf32> to vector<64x1xf32>
    %25 = vector.broadcast %24 : vector<64x1xf32> to vector<64x16xf32>
    %26 = arith.subf %22, %25 : vector<64x16xf32>
    %27 = math.exp %26 : vector<64x16xf32>
    %cst_13 = arith.constant dense<0.000000e+00> : vector<64xf32>
    %28 = vector.multi_reduction <add>, %27, %cst_13 [1] : vector<64x16xf32> to vector<64xf32>
    %29 = vector.shape_cast %28 : vector<64xf32> to vector<64x1xf32>
    %30 = tpu.reciprocal %29 : vector<64x1xf32> -> vector<64x1xf32>
    %31 = vector.broadcast %30 : vector<64x1xf32> to vector<64x16xf32>
    %32 = arith.mulf %27, %31 : vector<64x16xf32>
    %cst_14 = arith.constant 0.000000e+00 : f32
    %33 = vector.broadcast %cst_14 : f32 to vector<16x128xf32>
    %34 = vector.extract_strided_slice %32 {offsets = [0, 0], sizes = [16, 16], strides = [1, 1]} : vector<64x16xf32> to vector<16x16xf32>
    %35 = vector.extract_strided_slice %17 {offsets = [0, 0], sizes = [16, 128], strides = [1, 1]} : vector<64x128xf32> to vector<16x128xf32>
    %cst_15 = arith.constant dense<0.000000e+00> : vector<16x128xf32>
    %36 = tpu.matmul %34, %35, %cst_15 {dimension_numbers = #tpu.dot_dimension_numbers<[1], [0], [0], [1], [0, 0, 1, 1], [], []>} : vector<16x16xf32>, vector<16x128xf32>, vector<16x128xf32> -> vector<16x128xf32>
    %37 = arith.addf %33, %36 : vector<16x128xf32>
    %38 = vector.extract_strided_slice %32 {offsets = [16, 0], sizes = [16, 16], strides = [1, 1]} : vector<64x16xf32> to vector<16x16xf32>
    %39 = vector.extract_strided_slice %17 {offsets = [16, 0], sizes = [16, 128], strides = [1, 1]} : vector<64x128xf32> to vector<16x128xf32>
    %cst_16 = arith.constant dense<0.000000e+00> : vector<16x128xf32>
    %40 = tpu.matmul %38, %39, %cst_16 {dimension_numbers = #tpu.dot_dimension_numbers<[1], [0], [0], [1], [0, 0, 1, 1], [], []>} : vector<16x16xf32>, vector<16x128xf32>, vector<16x128xf32> -> vector<16x128xf32>
    %41 = arith.addf %37, %40 : vector<16x128xf32>
    %42 = vector.extract_strided_slice %32 {offsets = [32, 0], sizes = [16, 16], strides = [1, 1]} : vector<64x16xf32> to vector<16x16xf32>
    %43 = vector.extract_strided_slice %17 {offsets = [32, 0], sizes = [16, 128], strides = [1, 1]} : vector<64x128xf32> to vector<16x128xf32>
    %cst_17 = arith.constant dense<0.000000e+00> : vector<16x128xf32>
    %44 = tpu.matmul %42, %43, %cst_17 {dimension_numbers = #tpu.dot_dimension_numbers<[1], [0], [0], [1], [0, 0, 1, 1], [], []>} : vector<16x16xf32>, vector<16x128xf32>, vector<16x128xf32> -> vector<16x128xf32>
    %45 = arith.addf %41, %44 : vector<16x128xf32>
    %46 = vector.extract_strided_slice %32 {offsets = [48, 0], sizes = [16, 16], strides = [1, 1]} : vector<64x16xf32> to vector<16x16xf32>
    %47 = vector.extract_strided_slice %17 {offsets = [48, 0], sizes = [16, 128], strides = [1, 1]} : vector<64x128xf32> to vector<16x128xf32>
    %cst_18 = arith.constant dense<0.000000e+00> : vector<16x128xf32>
    %48 = tpu.matmul %46, %47, %cst_18 {dimension_numbers = #tpu.dot_dimension_numbers<[1], [0], [0], [1], [0, 0, 1, 1], [], []>} : vector<16x16xf32>, vector<16x128xf32>, vector<16x128xf32> -> vector<16x128xf32>
    %49 = arith.addf %45, %48 : vector<16x128xf32>
    %c0_19 = arith.constant 0 : index
    %c0_20 = arith.constant 0 : index
    %50 = vector.load %arg3[%c0_19, %c0_20] : memref<128x128xf32, #tpu.memory_space<vmem>>, vector<128x128xf32>
    %cst_21 = arith.constant dense<0.000000e+00> : vector<16x128xf32>
    %51 = tpu.matmul %49, %50, %cst_21 {dimension_numbers = #tpu.dot_dimension_numbers<[1], [0], [0], [1], [0, 0, 1, 1], [], []>} : vector<16x128xf32>, vector<128x128xf32>, vector<16x128xf32> -> vector<16x128xf32>
    %c0_22 = arith.constant 0 : index
    %c0_23 = arith.constant 0 : index
    %52 = vector.load %arg4[%c0_22, %c0_23] : memref<1x128xf32, #tpu.memory_space<vmem>>, vector<1x128xf32>
    %53 = vector.broadcast %52 : vector<1x128xf32> to vector<16x128xf32>
    %54 = arith.addf %51, %53 : vector<16x128xf32>
    %c0_24 = arith.constant 0 : index
    %c0_25 = arith.constant 0 : index
    %55 = vector.load %arg7[%c0_24, %c0_25] : memref<16x128xf32, #tpu.memory_space<vmem>>, vector<16x128xf32>
    tpu.vector_store %arg7[%c0_24, %c0_25], %54 {strides = array<i32>} : memref<16x128xf32, #tpu.memory_space<vmem>>, vector<16x128xf32>,
    return
  }
}

</mosaic_0001>

<llo_original>
// kernel: bigram_forward.1
$region0: #{bigram_forward.1}
  #allocation0 [shape = 'u32[]', space=smem, size = 0x4, offset = 0x4, fixed_abs, tag = 'smem constant byte address 0x4 - core index']
  #allocation1 [shape = 'u32[144,128]{1,0:T(1,128)}', space=vmem, size = 0x12000, scoped, tag = 'internal scratch']
  %s0 = inlined_call_operand.vmem [shape: s32[16,1], index: 0, kind: input, shape index: {}]
  %s1 = inlined_call_operand.vmem [shape: f32[8,32], index: 1, kind: input, shape index: {}]
  %s2 = inlined_call_operand.vmem [shape: f32[32,384], index: 2, kind: input, shape index: {}]
  %s3 = inlined_call_operand.hbm [shape: f32[128,128], index: 3, kind: input, shape index: {}]
  %s4 = inlined_call_operand.vmem [shape: f32[1,128], index: 4, kind: input, shape index: {}]
  %s5 = inlined_call_operand.hbm [shape: f32[64,128], index: 5, kind: input, shape index: {}]
  %s6 = inlined_call_operand.vmem [shape: f32[64,16], index: 6, kind: input, shape index: {}]
  %s7 = inlined_call_operand.vmem [shape: f32[16,128], index: 7, kind: output, shape index: {}]
  %s8 = sld [smem:[#allocation0]]
  $region46: #{bigram_forward.1} parent=0
    _
  %s10 = ssub.s32 1, %s8
  %s11 = scalar_select 0, %s10, %s8
  $region1: #{bigram_forward.1} parent=0
    #allocation2 [shape = 'u8[65536]{0}', space=vmem, size = 0x10000, scoped, tag = 'input window, operand 3, single buffered']
    #allocation3 [shape = 's32[1]{0}', space=sflag, size = 0x4, scoped, tag = 'scoped memory for bigram_forward.1']
    #allocation4 [shape = 'u8[32768]{0}', space=vmem, size = 0x8000, scoped, tag = 'input window, operand 5, single buffered']
    #allocation5 [shape = 's32[1]{0}', space=sflag, size = 0x4, scoped, tag = 'scoped memory for bigram_forward.1']
    %12 = vsyncpa [#allocation3], 0
    %13 = vsyncpa [#allocation5], 0
    // Predicated region
    $region2: #{bigram_forward.1} parent=1 // pred_check
      _
    $region3: #{bigram_forward.1} parent=1 // pred_check_branch
      %15 = sbr.rel (0) target = $region5
    $region4: #{bigram_forward.1} parent=1 // pred_region
      _
    $region5: #{bigram_forward.1} parent=1 // pred_fallthru
      _
    // Predicated region
    $region6: #{bigram_forward.1} parent=1 // pred_check
      _
    $region7: #{bigram_forward.1} parent=1 // pred_check_branch
      %17 = sbr.rel (0) target = $region9
    $region8: #{bigram_forward.1} parent=1 // pred_region
      _
    $region9: #{bigram_forward.1} parent=1 // pred_fallthru
      _
    // Predicated region
    $region10: #{bigram_forward.1} parent=1 // pred_check
      _
    $region11: #{bigram_forward.1} parent=1 // pred_check_branch
      %19 = sbr.rel (0) target = $region13
    $region12: #{bigram_forward.1} parent=1 // pred_region
      _
    $region13: #{bigram_forward.1} parent=1 // pred_fallthru
      _
    // Predicated region
    $region14: #{bigram_forward.1} parent=1 // pred_check
      _
    $region15: #{bigram_forward.1} parent=1 // pred_check_branch
      %21 = sbr.rel (0) target = $region17
    $region16: #{bigram_forward.1} parent=1 // pred_region
      %s23 = ssub.s32 2048, 2048
      %24 = vsyncadd [#allocation3], %s23
      %s25 = sshll.u32 [#allocation2], 4
      %s26 = int_to_ptr.vmem [resolvable:$true] %s25
      %31 = dma.hbm_to_vmem [thread:$0]  %s3, 2048, %s26, [#allocation3], 128, 128, 8
    $region17: #{bigram_forward.1} parent=1 // pred_fallthru
      _
    // Predicated region
    $region18: #{bigram_forward.1} parent=1 // pred_check
      _
    $region19: #{bigram_forward.1} parent=1 // pred_check_branch
      %33 = sbr.rel (0) target = $region21
    $region20: #{bigram_forward.1} parent=1 // pred_region
      _
    $region21: #{bigram_forward.1} parent=1 // pred_fallthru
      _
    // Predicated region
    $region22: #{bigram_forward.1} parent=1 // pred_check
      _
    $region23: #{bigram_forward.1} parent=1 // pred_check_branch
      %35 = sbr.rel (0) target = $region25
    $region24: #{bigram_forward.1} parent=1 // pred_region
      %s37 = ssub.s32 1024, 1024
      %38 = vsyncadd [#allocation5], %s37
      %s39 = sshll.u32 [#allocation4], 4
      %s40 = int_to_ptr.vmem [resolvable:$true] %s39
      %45 = dma.hbm_to_vmem [thread:$0]  %s5, 1024, %s40, [#allocation5], 128, 128, 8
    $region25: #{bigram_forward.1} parent=1 // pred_fallthru
      _
    // Predicated region
    $region26: #{bigram_forward.1} parent=1 // pred_check
      _
    $region27: #{bigram_forward.1} parent=1 // pred_check_branch
      %47 = sbr.rel (0) target = $region29
    $region28: #{bigram_forward.1} parent=1 // pred_region
      _
    $region29: #{bigram_forward.1} parent=1 // pred_fallthru
      _
    // Predicated region
    $region30: #{bigram_forward.1} parent=1 // pred_check
      _
    $region31: #{bigram_forward.1} parent=1 // pred_check_branch
      %49 = sbr.rel (0) target = $region33
    $region32: #{bigram_forward.1} parent=1 // pred_region
      %50 = dma.done [#allocation3], 2048
    $region33: #{bigram_forward.1} parent=1 // pred_fallthru
      _
    // Predicated region
    $region34: #{bigram_forward.1} parent=1 // pred_check
      _
    $region35: #{bigram_forward.1} parent=1 // pred_check_branch
      %52 = sbr.rel (0) target = $region37
    $region36: #{bigram_forward.1} parent=1 // pred_region
      %53 = dma.done [#allocation5], 1024
    $region37: #{bigram_forward.1} parent=1 // pred_fallthru
      _
    %v54 = vld [vmem:[%s0] sm:$0xff]
    %v55 = vld [vmem:[%s0 + $0x8] sm:$0xff]
    %v56 = vlaneseq
    %v57 = vand.u32 %v56, 127
    %58 = vset.pattern.permute.xlu0 0
    %59 = vperm.xlu0 %58, %v54
    %v60 = vpop.permute.xlu0 %59
    %61 = vset.pattern.permute.xlu0 0
    %62 = vperm.xlu0 %61, %v55
    %v63 = vpop.permute.xlu0 %62
    %vm64 = vcmp.eq.s32.totalorder %v60, %v57
    %vm65 = vcmp.eq.s32.totalorder %v63, %v57
    %v66 = vsel %vm64, 1, 0
    %v67 = vsel %vm65, 1, 0
    %v68 = vcvt.s32.f32 %v66
    %v69 = vcvt.s32.f32 %v67
    %v70 = vld [vmem:[%s1] sm:$0xff]
    %vm71 = vcmask 64512
    %v73 = vsel %vm71, %v68, 0
    %v76 = vsel %vm71, %v69, 0
    %78 = vmatprep.subr.mxu0 0.0
    %79 = vmatpush1.msra.mxu0 %v70
    %80 = vmatprep.subr.mxu0 0.0
    %81 = vmatpush1.msra.mxu0 0.0
    %82 = vmatprep.subr.mxu0 0.0
    %83 = vmatpush1.msra.mxu0 0.0
    %84 = vmatprep.subr.mxu0 0.0
    %85 = vmatpush1.msra.mxu0 0.0
    %86 = vmatprep.subr.mxu0 0.0
    %87 = vmatpush1.msra.mxu0 0.0
    %88 = vmatprep.subr.mxu0 0.0
    %89 = vmatpush1.msra.mxu0 0.0
    %90 = vmatprep.subr.mxu0 0.0
    %91 = vmatpush1.msra.mxu0 0.0
    %92 = vmatprep.subr.mxu0 0.0
    %93 = vmatpush1.msra.mxu0 0.0
    %94 = vmatprep.subr.mxu0 0.0
    %95 = vmatpush1.msra.mxu0 0.0
    %96 = vmatprep.subr.mxu0 0.0
    %97 = vmatpush1.msra.mxu0 0.0
    %98 = vmatprep.subr.mxu0 0.0
    %99 = vmatpush1.msra.mxu0 0.0
    %100 = vmatprep.subr.mxu0 0.0
    %101 = vmatpush1.msra.mxu0 0.0
    %102 = vmatprep.subr.mxu0 0.0
    %103 = vmatpush1.msra.mxu0 0.0
    %104 = vmatprep.subr.mxu0 0.0
    %105 = vmatpush1.msra.mxu0 0.0
    %106 = vmatprep.subr.mxu0 0.0
    %107 = vmatpush1.msra.mxu0 0.0
    %108 = vmatprep.subr.mxu0 0.0
    %109 = vmatpush1.msra.mxu0 0.0
    %110 = vmatprep.subr.mxu0 0.0
    %111 = vmatpush1.msra.mxu0 0.0
    %112 = vmatprep.subr.mxu0 0.0
    %113 = vmatpush1.msra.mxu0 0.0
    %114 = vmatprep.subr.mxu0 0.0
    %115 = vmatpush1.msra.mxu0 0.0
    %116 = vmatprep.subr.mxu0 0.0
    %117 = vmatpush1.msra.mxu0 0.0
    %118 = vmatprep.subr.mxu0 0.0
    %119 = vmatpush1.msra.mxu0 0.0
    %120 = vmatprep.subr.mxu0 0.0
    %121 = vmatpush1.msra.mxu0 0.0
    %122 = vmatprep.subr.mxu0 0.0
    %123 = vmatpush1.msra.mxu0 0.0
    %124 = vmatprep.subr.mxu0 0.0
    %125 = vmatpush1.msra.mxu0 0.0
    %126 = vmatprep.subr.mxu0 0.0
    %127 = vmatpush1.msra.mxu0 0.0
    %128 = vmatprep.subr.mxu0 0.0
    %129 = vmatpush1.msra.mxu0 0.0
    %130 = vmatprep.subr.mxu0 0.0
    %131 = vmatpush1.msra.mxu0 0.0
    %132 = vmatprep.subr.mxu0 0.0
    %133 = vmatpush1.msra.mxu0 0.0
    %134 = vmatprep.subr.mxu0 0.0
    %135 = vmatpush1.msra.mxu0 0.0
    %136 = vmatprep.subr.mxu0 0.0
    %137 = vmatpush1.msra.mxu0 0.0
    %138 = vmatprep.subr.mxu0 0.0
    %139 = vmatpush1.msra.mxu0 0.0
    %140 = vmatprep.subr.mxu0 0.0
    %141 = vmatpush1.msra.mxu0 0.0
    %142 = vmatprep.mubr.f32.mxu0 0.0
    %143 = vmatmul.mubr.f32.gmra.mrb[0].mxu0 %v73
    %v144 = vpop.f32.mrb[0].mxu0
    %v145 = vadd.f32 0.0, %v144
    %v146 = vpop.f32.mrb[0].mxu0
    %147 = vmatprep.mubr.f32.mxu0 0.0
    %148 = vmatmul.mubr.f32.gmra.mrb[0].mxu0 %v76
    %v149 = vpop.f32.mrb[0].mxu0
    %v150 = vadd.f32 0.0, %v149
    %v151 = vpop.f32.mrb[0].mxu0
    %152 = vdwg.mxu0
    %v153 = vld [vmem:[%s2] sm:$0xff]
    %v154 = vld [vmem:[%s2 + $0x8] sm:$0xff]
    %v155 = vld [vmem:[%s2 + $0x10] sm:$0xff]
    %v156 = vld [vmem:[%s2 + $0x18] sm:$0xff]
    %v157 = vld [vmem:[%s2 + $0x20] sm:$0xff]
    %v158 = vld [vmem:[%s2 + $0x28] sm:$0xff]
    %v159 = vld [vmem:[%s2 + $0x30] sm:$0xff]
    %v160 = vld [vmem:[%s2 + $0x38] sm:$0xff]
    %v161 = vld [vmem:[%s2 + $0x40] sm:$0xff]
    %v162 = vld [vmem:[%s2 + $0x48] sm:$0xff]
    %v163 = vld [vmem:[%s2 + $0x50] sm:$0xff]
    %v164 = vld [vmem:[%s2 + $0x58] sm:$0xff]
    %vm165 = vcmask 261120
    %v167 = vsel %vm165, %v145, 0
    %v170 = vsel %vm165, %v150, 0
    %172 = vmatprep.subr.mxu0 %v154
    %173 = vmatpush1.msra.mxu0 %v153
    %174 = vmatprep.subr.mxu0 %v157
    %175 = vmatpush1.msra.mxu0 %v156
    %176 = vmatprep.subr.mxu0 %v160
    %177 = vmatpush1.msra.mxu0 %v159
    %178 = vmatprep.subr.mxu0 %v163
    %179 = vmatpush1.msra.mxu0 %v162
    %180 = vmatprep.subr.mxu0 0.0
    %181 = vmatpush1.msra.mxu0 0.0
    %182 = vmatprep.subr.mxu0 0.0
    %183 = vmatpush1.msra.mxu0 0.0
    %184 = vmatprep.subr.mxu0 0.0
    %185 = vmatpush1.msra.mxu0 0.0
    %186 = vmatprep.subr.mxu0 0.0
    %187 = vmatpush1.msra.mxu0 0.0
    %188 = vmatprep.subr.mxu0 0.0
    %189 = vmatpush1.msra.mxu0 0.0
    %190 = vmatprep.subr.mxu0 0.0
    %191 = vmatpush1.msra.mxu0 0.0
    %192 = vmatprep.subr.mxu0 0.0
    %193 = vmatpush1.msra.mxu0 0.0
    %194 = vmatprep.subr.mxu0 0.0
    %195 = vmatpush1.msra.mxu0 0.0
    %196 = vmatprep.subr.mxu0 0.0
    %197 = vmatpush1.msra.mxu0 0.0
    %198 = vmatprep.subr.mxu0 0.0
    %199 = vmatpush1.msra.mxu0 0.0
    %200 = vmatprep.subr.mxu0 0.0
    %201 = vmatpush1.msra.mxu0 0.0
    %202 = vmatprep.subr.mxu0 0.0
    %203 = vmatpush1.msra.mxu0 0.0
    %204 = vmatprep.subr.mxu0 0.0
    %205 = vmatpush1.msra.mxu0 0.0
    %206 = vmatprep.subr.mxu0 0.0
    %207 = vmatpush1.msra.mxu0 0.0
    %208 = vmatprep.subr.mxu0 0.0
    %209 = vmatpush1.msra.mxu0 0.0
    %210 = vmatprep.subr.mxu0 0.0
    %211 = vmatpush1.msra.mxu0 0.0
    %212 = vmatprep.subr.mxu0 0.0
    %213 = vmatpush1.msra.mxu0 0.0
    %214 = vmatprep.subr.mxu0 0.0
    %215 = vmatpush1.msra.mxu0 0.0
    %216 = vmatprep.subr.mxu0 0.0
    %217 = vmatpush1.msra.mxu0 0.0
    %218 = vmatprep.subr.mxu0 0.0
    %219 = vmatpush1.msra.mxu0 0.0
    %220 = vmatprep.subr.mxu0 0.0
    %221 = vmatpush1.msra.mxu0 0.0
    %222 = vmatprep.subr.mxu0 0.0
    %223 = vmatpush1.msra.mxu0 0.0
    %224 = vmatprep.subr.mxu0 0.0
    %225 = vmatpush1.msra.mxu0 0.0
    %226 = vmatprep.subr.mxu0 0.0
    %227 = vmatpush1.msra.mxu0 0.0
    %228 = vmatprep.subr.mxu0 0.0
    %229 = vmatpush1.msra.mxu0 0.0
    %230 = vmatprep.subr.mxu0 0.0
    %231 = vmatpush1.msra.mxu0 0.0
    %232 = vmatprep.subr.mxu0 0.0
    %233 = vmatpush1.msra.mxu0 0.0
    %234 = vmatprep.subr.mxu0 0.0
    %235 = vmatpush1.msra.mxu0 0.0
    %236 = vmatprep.mubr.f32.mxu0 0.0
    %237 = vmatmul.mubr.f32.gmra.mrb[0].mxu0 %v167
    %v238 = vpop.f32.mrb[0].mxu0
    %v239 = vadd.f32 0.0, %v238
    %v240 = vpop.f32.mrb[0].mxu0
    %v241 = vadd.f32 0.0, %v240
    %242 = vmatprep.mubr.f32.mxu0 0.0
    %243 = vmatmul.mubr.f32.gmra.mrb[0].mxu0 %v170
    %v244 = vpop.f32.mrb[0].mxu0
    %v245 = vadd.f32 0.0, %v244
    %v246 = vpop.f32.mrb[0].mxu0
    %v247 = vadd.f32 0.0, %v246
    %248 = vdwg.mxu0
    %249 = vmatprep.subr.mxu0 0.0
    %250 = vmatpush1.msra.mxu0 %v155
    %251 = vmatprep.subr.mxu0 0.0
    %252 = vmatpush1.msra.mxu0 %v158
    %253 = vmatprep.subr.mxu0 0.0
    %254 = vmatpush1.msra.mxu0 %v161
    %255 = vmatprep.subr.mxu0 0.0
    %256 = vmatpush1.msra.mxu0 %v164
    %257 = vmatprep.subr.mxu0 0.0
    %258 = vmatpush1.msra.mxu0 0.0
    %259 = vmatprep.subr.mxu0 0.0
    %260 = vmatpush1.msra.mxu0 0.0
    %261 = vmatprep.subr.mxu0 0.0
    %262 = vmatpush1.msra.mxu0 0.0
    %263 = vmatprep.subr.mxu0 0.0
    %264 = vmatpush1.msra.mxu0 0.0
    %265 = vmatprep.subr.mxu0 0.0
    %266 = vmatpush1.msra.mxu0 0.0
    %267 = vmatprep.subr.mxu0 0.0
    %268 = vmatpush1.msra.mxu0 0.0
    %269 = vmatprep.subr.mxu0 0.0
    %270 = vmatpush1.msra.mxu0 0.0
    %271 = vmatprep.subr.mxu0 0.0
    %272 = vmatpush1.msra.mxu0 0.0
    %273 = vmatprep.subr.mxu0 0.0
    %274 = vmatpush1.msra.mxu0 0.0
    %275 = vmatprep.subr.mxu0 0.0
    %276 = vmatpush1.msra.mxu0 0.0
    %277 = vmatprep.subr.mxu0 0.0
    %278 = vmatpush1.msra.mxu0 0.0
    %279 = vmatprep.subr.mxu0 0.0
    %280 = vmatpush1.msra.mxu0 0.0
    %281 = vmatprep.subr.mxu0 0.0
    %282 = vmatpush1.msra.mxu0 0.0
    %283 = vmatprep.subr.mxu0 0.0
    %284 = vmatpush1.msra.mxu0 0.0
    %285 = vmatprep.subr.mxu0 0.0
    %286 = vmatpush1.msra.mxu0 0.0
    %287 = vmatprep.subr.mxu0 0.0
    %288 = vmatpush1.msra.mxu0 0.0
    %289 = vmatprep.subr.mxu0 0.0
    %290 = vmatpush1.msra.mxu0 0.0
    %291 = vmatprep.subr.mxu0 0.0
    %292 = vmatpush1.msra.mxu0 0.0
    %293 = vmatprep.subr.mxu0 0.0
    %294 = vmatpush1.msra.mxu0 0.0
    %295 = vmatprep.subr.mxu0 0.0
    %296 = vmatpush1.msra.mxu0 0.0
    %297 = vmatprep.subr.mxu0 0.0
    %298 = vmatpush1.msra.mxu0 0.0
    %299 = vmatprep.subr.mxu0 0.0
    %300 = vmatpush1.msra.mxu0 0.0
    %301 = vmatprep.subr.mxu0 0.0
    %302 = vmatpush1.msra.mxu0 0.0
    %303 = vmatprep.subr.mxu0 0.0
    %304 = vmatpush1.msra.mxu0 0.0
    %305 = vmatprep.subr.mxu0 0.0
    %306 = vmatpush1.msra.mxu0 0.0
    %307 = vmatprep.subr.mxu0 0.0
    %308 = vmatpush1.msra.mxu0 0.0
    %309 = vmatprep.subr.mxu0 0.0
    %310 = vmatpush1.msra.mxu0 0.0
    %311 = vmatprep.subr.mxu0 0.0
    %312 = vmatpush1.msra.mxu0 0.0
    %313 = vmatprep.mubr.f32.mxu0 0.0
    %314 = vmatmul.mubr.f32.gmra.mrb[0].mxu0 %v167
    %v315 = vpop.f32.mrb[0].mxu0
    %v316 = vadd.f32 0.0, %v315
    %v317 = vpop.f32.mrb[0].mxu0
    %318 = vmatprep.mubr.f32.mxu0 0.0
    %319 = vmatmul.mubr.f32.gmra.mrb[0].mxu0 %v170
    %v320 = vpop.f32.mrb[0].mxu0
    %v321 = vadd.f32 0.0, %v320
    %v322 = vpop.f32.mrb[0].mxu0
    %323 = vdwg.mxu0
    %v324 = vld [vmem:[#allocation4] sm:$0xff]
    %v325 = vld [vmem:[#allocation4 + $0x8] sm:$0xff]
    %v326 = vld [vmem:[#allocation4 + $0x10] sm:$0xff]
    %v327 = vld [vmem:[#allocation4 + $0x18] sm:$0xff]
    %v328 = vld [vmem:[#allocation4 + $0x20] sm:$0xff]
    %v329 = vld [vmem:[#allocation4 + $0x28] sm:$0xff]
    %v330 = vld [vmem:[#allocation4 + $0x30] sm:$0xff]
    %v331 = vld [vmem:[#allocation4 + $0x38] sm:$0xff]
    %v332 = vmul.f32 %v239, %v324
    %v333 = vmul.f32 %v245, %v325
    %v334 = vmul.f32 %v239, %v326
    %v335 = vmul.f32 %v245, %v327
    %v336 = vmul.f32 %v239, %v328
    %v337 = vmul.f32 %v245, %v329
    %v338 = vmul.f32 %v239, %v330
    %v339 = vmul.f32 %v245, %v331
    %v340 = vmul.f32 %v316, %v324
    %v341 = vmul.f32 %v321, %v325
    %v342 = vmul.f32 %v316, %v326
    %v343 = vmul.f32 %v321, %v327
    %v344 = vmul.f32 %v316, %v328
    %v345 = vmul.f32 %v321, %v329
    %v346 = vmul.f32 %v316, %v330
    %v347 = vmul.f32 %v321, %v331
    %348 = vmatprep.subr.mxu0 0.0
    %349 = vmatpush1.xpose.msra.mxu0 %v241
    %350 = vmatprep.subr.mxu0 0.0
    %351 = vmatpush1.xpose.msra.mxu0 %v247
    %352 = vmatprep.subr.mxu0 0.0
    %353 = vmatpush1.xpose.msra.mxu0 0.0
    %354 = vmatprep.subr.mxu0 0.0
    %355 = vmatpush1.xpose.msra.mxu0 0.0
    %356 = vmatprep.subr.mxu0 0.0
    %357 = vmatpush1.xpose.msra.mxu0 0.0
    %358 = vmatprep.subr.mxu0 0.0
    %359 = vmatpush1.xpose.msra.mxu0 0.0
    %360 = vmatprep.subr.mxu0 0.0
    %361 = vmatpush1.xpose.msra.mxu0 0.0
    %362 = vmatprep.subr.mxu0 0.0
    %363 = vmatpush1.xpose.msra.mxu0 0.0
    %364 = vmatprep.subr.mxu0 0.0
    %365 = vmatpush1.xpose.msra.mxu0 0.0
    %366 = vmatprep.subr.mxu0 0.0
    %367 = vmatpush1.xpose.msra.mxu0 0.0
    %368 = vmatprep.subr.mxu0 0.0
    %369 = vmatpush1.xpose.msra.mxu0 0.0
    %370 = vmatprep.subr.mxu0 0.0
    %371 = vmatpush1.xpose.msra.mxu0 0.0
    %372 = vmatprep.subr.mxu0 0.0
    %373 = vmatpush1.xpose.msra.mxu0 0.0
    %374 = vmatprep.subr.mxu0 0.0
    %375 = vmatpush1.xpose.msra.mxu0 0.0
    %376 = vmatprep.subr.mxu0 0.0
    %377 = vmatpush1.xpose.msra.mxu0 0.0
    %378 = vmatprep.subr.mxu0 0.0
    %379 = vmatpush1.xpose.msra.mxu0 0.0
    %380 = vmatprep.subr.mxu0 0.0
    %381 = vmatpush1.xpose.msra.mxu0 0.0
    %382 = vmatprep.subr.mxu0 0.0
    %383 = vmatpush1.xpose.msra.mxu0 0.0
    %384 = vmatprep.subr.mxu0 0.0
    %385 = vmatpush1.xpose.msra.mxu0 0.0
    %386 = vmatprep.subr.mxu0 0.0
    %387 = vmatpush1.xpose.msra.mxu0 0.0
    %388 = vmatprep.subr.mxu0 0.0
    %389 = vmatpush1.xpose.msra.mxu0 0.0
    %390 = vmatprep.subr.mxu0 0.0
    %391 = vmatpush1.xpose.msra.mxu0 0.0
    %392 = vmatprep.subr.mxu0 0.0
    %393 = vmatpush1.xpose.msra.mxu0 0.0
    %394 = vmatprep.subr.mxu0 0.0
    %395 = vmatpush1.xpose.msra.mxu0 0.0
    %396 = vmatprep.subr.mxu0 0.0
    %397 = vmatpush1.xpose.msra.mxu0 0.0
    %398 = vmatprep.subr.mxu0 0.0
    %399 = vmatpush1.xpose.msra.mxu0 0.0
    %400 = vmatprep.subr.mxu0 0.0
    %401 = vmatpush1.xpose.msra.mxu0 0.0
    %402 = vmatprep.subr.mxu0 0.0
    %403 = vmatpush1.xpose.msra.mxu0 0.0
    %404 = vmatprep.subr.mxu0 0.0
    %405 = vmatpush1.xpose.msra.mxu0 0.0
    %406 = vmatprep.subr.mxu0 0.0
    %407 = vmatpush1.xpose.msra.mxu0 0.0
    %408 = vmatprep.subr.mxu0 0.0
    %409 = vmatpush1.xpose.msra.mxu0 0.0
    %410 = vmatprep.subr.mxu0 0.0
    %411 = vmatpush1.xpose.msra.mxu0 0.0
    %412 = vmatprep.mubr.f32.mxu0 0.0
    %413 = vmatmul.mubr.f32.gmra.mrb[0].mxu0 %v332
    %v414 = vpop.f32.mrb[0].mxu0
    %v415 = vadd.f32 0.0, %v414
    %v416 = vpop.f32.mrb[0].mxu0
    %417 = vmatprep.mubr.f32.mxu0 0.0
    %418 = vmatmul.mubr.f32.gmra.mrb[0].mxu0 %v333
    %v419 = vpop.f32.mrb[0].mxu0
    %v420 = vadd.f32 0.0, %v419
    %v421 = vpop.f32.mrb[0].mxu0
    %422 = vmatprep.mubr.f32.mxu0 0.0
    %423 = vmatmul.mubr.f32.gmra.mrb[0].mxu0 %v334
    %v424 = vpop.f32.mrb[0].mxu0
    %v425 = vadd.f32 0.0, %v424
    %v426 = vpop.f32.mrb[0].mxu0
    %427 = vmatprep.mubr.f32.mxu0 0.0
    %428 = vmatmul.mubr.f32.gmra.mrb[0].mxu0 %v335
    %v429 = vpop.f32.mrb[0].mxu0
    %v430 = vadd.f32 0.0, %v429
    %v431 = vpop.f32.mrb[0].mxu0
    %432 = vmatprep.mubr.f32.mxu0 0.0
    %433 = vmatmul.mubr.f32.gmra.mrb[0].mxu0 %v336
    %v434 = vpop.f32.mrb[0].mxu0
    %v435 = vadd.f32 0.0, %v434
    %v436 = vpop.f32.mrb[0].mxu0
    %437 = vmatprep.mubr.f32.mxu0 0.0
    %438 = vmatmul.mubr.f32.gmra.mrb[0].mxu0 %v337
    %v439 = vpop.f32.mrb[0].mxu0
    %v440 = vadd.f32 0.0, %v439
    %v441 = vpop.f32.mrb[0].mxu0
    %442 = vmatprep.mubr.f32.mxu0 0.0
    %443 = vmatmul.mubr.f32.gmra.mrb[0].mxu0 %v338
    %v444 = vpop.f32.mrb[0].mxu0
    %v445 = vadd.f32 0.0, %v444
    %v446 = vpop.f32.mrb[0].mxu0
    %447 = vmatprep.mubr.f32.mxu0 0.0
    %448 = vmatmul.mubr.f32.gmra.mrb[0].mxu0 %v339
    %v449 = vpop.f32.mrb[0].mxu0
    %v450 = vadd.f32 0.0, %v449
    %v451 = vpop.f32.mrb[0].mxu0
    %452 = vdwg.mxu0
    %v453 = vmul.f32 %v415, 0.17677669
    %v454 = vmul.f32 %v420, 0.17677669
    %v455 = vmul.f32 %v425, 0.17677669
    %v456 = vmul.f32 %v430, 0.17677669
    %v457 = vmul.f32 %v435, 0.17677669
    %v458 = vmul.f32 %v440, 0.17677669
    %v459 = vmul.f32 %v445, 0.17677669
    %v460 = vmul.f32 %v450, 0.17677669
    %v461 = vld [vmem:[%s6] sm:$0xff]
    %v462 = vld [vmem:[%s6 + $0x8] sm:$0xff]
    %v463 = vld [vmem:[%s6 + $0x10] sm:$0xff]
    %v464 = vld [vmem:[%s6 + $0x18] sm:$0xff]
    %v465 = vld [vmem:[%s6 + $0x20] sm:$0xff]
    %v466 = vld [vmem:[%s6 + $0x28] sm:$0xff]
    %v467 = vld [vmem:[%s6 + $0x30] sm:$0xff]
    %v468 = vld [vmem:[%s6 + $0x38] sm:$0xff]
    %v469 = vadd.f32 %v453, %v461
    %v470 = vadd.f32 %v454, %v462
    %v471 = vadd.f32 %v455, %v463
    %v472 = vadd.f32 %v456, %v464
    %v473 = vadd.f32 %v457, %v465
    %v474 = vadd.f32 %v458, %v466
    %v475 = vadd.f32 %v459, %v467
    %v476 = vadd.f32 %v460, %v468
    %vm477 = vcmask 130048
    %v478 = vsel %vm477, %v469, -inf
    %479 = vmax.xlane.f32.xlu0 %v478
    %v480 = vpop.xlane.xlu0 %479
    %v481 = vsel %vm477, %v470, -inf
    %482 = vmax.xlane.f32.xlu0 %v481
    %v483 = vpop.xlane.xlu0 %482
    %v484 = vsel %vm477, %v471, -inf
    %485 = vmax.xlane.f32.xlu0 %v484
    %v486 = vpop.xlane.xlu0 %485
    %v487 = vsel %vm477, %v472, -inf
    %488 = vmax.xlane.f32.xlu0 %v487
    %v489 = vpop.xlane.xlu0 %488
    %v490 = vsel %vm477, %v473, -inf
    %491 = vmax.xlane.f32.xlu0 %v490
    %v492 = vpop.xlane.xlu0 %491
    %v493 = vsel %vm477, %v474, -inf
    %494 = vmax.xlane.f32.xlu0 %v493
    %v495 = vpop.xlane.xlu0 %494
    %v496 = vsel %vm477, %v475, -inf
    %497 = vmax.xlane.f32.xlu0 %v496
    %v498 = vpop.xlane.xlu0 %497
    %v499 = vsel %vm477, %v476, -inf
    %500 = vmax.xlane.f32.xlu0 %v499
    %v501 = vpop.xlane.xlu0 %500
    %v502 = vsub.f32 %v469, %v480
    %v503 = vsub.f32 %v470, %v483
    %v504 = vsub.f32 %v471, %v486
    %v505 = vsub.f32 %v472, %v489
    %v506 = vsub.f32 %v473, %v492
    %v507 = vsub.f32 %v474, %v495
    %v508 = vsub.f32 %v475, %v498
    %v509 = vsub.f32 %v476, %v501
    %v510 = vmul.f32 %v502, 1.442695
    %v511 = vpow.pop %v510
    %v512 = vmul.f32 %v503, 1.442695
    %v513 = vpow.pop %v512
    %v514 = vmul.f32 %v504, 1.442695
    %v515 = vpow.pop %v514
    %v516 = vmul.f32 %v505, 1.442695
    %v517 = vpow.pop %v516
    %v518 = vmul.f32 %v506, 1.442695
    %v519 = vpow.pop %v518
    %v520 = vmul.f32 %v507, 1.442695
    %v521 = vpow.pop %v520
    %v522 = vmul.f32 %v508, 1.442695
    %v523 = vpow.pop %v522
    %v524 = vmul.f32 %v509, 1.442695
    %v525 = vpow.pop %v524
    %v526 = vsel %vm477, %v511, 0.0
    %527 = vadd.xlane.f32.xlu0 %v526
    %v528 = vpop.xlane.xlu0 %527
    %v529 = vsel %vm477, %v513, 0.0
    %530 = vadd.xlane.f32.xlu0 %v529
    %v531 = vpop.xlane.xlu0 %530
    %v532 = vsel %vm477, %v515, 0.0
    %533 = vadd.xlane.f32.xlu0 %v532
    %v534 = vpop.xlane.xlu0 %533
    %v535 = vsel %vm477, %v517, 0.0
    %536 = vadd.xlane.f32.xlu0 %v535
    %v537 = vpop.xlane.xlu0 %536
    %v538 = vsel %vm477, %v519, 0.0
    %539 = vadd.xlane.f32.xlu0 %v538
    %v540 = vpop.xlane.xlu0 %539
    %v541 = vsel %vm477, %v521, 0.0
    %542 = vadd.xlane.f32.xlu0 %v541
    %v543 = vpop.xlane.xlu0 %542
    %v544 = vsel %vm477, %v523, 0.0
    %545 = vadd.xlane.f32.xlu0 %v544
    %v546 = vpop.xlane.xlu0 %545
    %v547 = vsel %vm477, %v525, 0.0
    %548 = vadd.xlane.f32.xlu0 %v547
    %v549 = vpop.xlane.xlu0 %548
    %v550 = vrcp.pop %v528
    %v551 = vrcp.pop %v531
    %v552 = vrcp.pop %v534
    %v553 = vrcp.pop %v537
    %v554 = vrcp.pop %v540
    %v555 = vrcp.pop %v543
    %v556 = vrcp.pop %v546
    %v557 = vrcp.pop %v549
    %v558 = vmul.f32 %v511, %v550
    %v559 = vmul.f32 %v513, %v551
    %v560 = vmul.f32 %v515, %v552
    %v561 = vmul.f32 %v517, %v553
    %v562 = vmul.f32 %v519, %v554
    %v563 = vmul.f32 %v521, %v555
    %v564 = vmul.f32 %v523, %v556
    %v565 = vmul.f32 %v525, %v557
    %v567 = vsel %vm477, %v560, 0
    %v570 = vsel %vm477, %v561, 0
    %572 = vmatprep.subr.mxu0 0.0
    %573 = vmatpush1.msra.mxu0 %v342
    %574 = vmatprep.subr.mxu0 0.0
    %575 = vmatpush1.msra.mxu0 %v343
    %576 = vmatprep.subr.mxu0 0.0
    %577 = vmatpush1.msra.mxu0 0.0
    %578 = vmatprep.subr.mxu0 0.0
    %579 = vmatpush1.msra.mxu0 0.0
    %580 = vmatprep.subr.mxu0 0.0
    %581 = vmatpush1.msra.mxu0 0.0
    %582 = vmatprep.subr.mxu0 0.0
    %583 = vmatpush1.msra.mxu0 0.0
    %584 = vmatprep.subr.mxu0 0.0
    %585 = vmatpush1.msra.mxu0 0.0
    %586 = vmatprep.subr.mxu0 0.0
    %587 = vmatpush1.msra.mxu0 0.0
    %588 = vmatprep.subr.mxu0 0.0
    %589 = vmatpush1.msra.mxu0 0.0
    %590 = vmatprep.subr.mxu0 0.0
    %591 = vmatpush1.msra.mxu0 0.0
    %592 = vmatprep.subr.mxu0 0.0
    %593 = vmatpush1.msra.mxu0 0.0
    %594 = vmatprep.subr.mxu0 0.0
    %595 = vmatpush1.msra.mxu0 0.0
    %596 = vmatprep.subr.mxu0 0.0
    %597 = vmatpush1.msra.mxu0 0.0
    %598 = vmatprep.subr.mxu0 0.0
    %599 = vmatpush1.msra.mxu0 0.0
    %600 = vmatprep.subr.mxu0 0.0
    %601 = vmatpush1.msra.mxu0 0.0
    %602 = vmatprep.subr.mxu0 0.0
    %603 = vmatpush1.msra.mxu0 0.0
    %604 = vmatprep.subr.mxu0 0.0
    %605 = vmatpush1.msra.mxu0 0.0
    %606 = vmatprep.subr.mxu0 0.0
    %607 = vmatpush1.msra.mxu0 0.0
    %608 = vmatprep.subr.mxu0 0.0
    %609 = vmatpush1.msra.mxu0 0.0
    %610 = vmatprep.subr.mxu0 0.0
    %611 = vmatpush1.msra.mxu0 0.0
    %612 = vmatprep.subr.mxu0 0.0
    %613 = vmatpush1.msra.mxu0 0.0
    %614 = vmatprep.subr.mxu0 0.0
    %615 = vmatpush1.msra.mxu0 0.0
    %616 = vmatprep.subr.mxu0 0.0
    %617 = vmatpush1.msra.mxu0 0.0
    %618 = vmatprep.subr.mxu0 0.0
    %619 = vmatpush1.msra.mxu0 0.0
    %620 = vmatprep.subr.mxu0 0.0
    %621 = vmatpush1.msra.mxu0 0.0
    %622 = vmatprep.subr.mxu0 0.0
    %623 = vmatpush1.msra.mxu0 0.0
    %624 = vmatprep.subr.mxu0 0.0
    %625 = vmatpush1.msra.mxu0 0.0
    %626 = vmatprep.subr.mxu0 0.0
    %627 = vmatpush1.msra.mxu0 0.0
    %628 = vmatprep.subr.mxu0 0.0
    %629 = vmatpush1.msra.mxu0 0.0
    %630 = vmatprep.subr.mxu0 0.0
    %631 = vmatpush1.msra.mxu0 0.0
    %632 = vmatprep.subr.mxu0 0.0
    %633 = vmatpush1.msra.mxu0 0.0
    %634 = vmatprep.subr.mxu0 0.0
    %635 = vmatpush1.msra.mxu0 0.0
    %636 = vmatprep.mubr.f32.mxu0 0.0
    %637 = vmatmul.mubr.f32.gmra.mrb[0].mxu0 %v567
    %v638 = vpop.f32.mrb[0].mxu0
    %v639 = vadd.f32 0.0, %v638
    %v640 = vpop.f32.mrb[0].mxu0
    %641 = vmatprep.mubr.f32.mxu0 0.0
    %642 = vmatmul.mubr.f32.gmra.mrb[0].mxu0 %v570
    %v643 = vpop.f32.mrb[0].mxu0
    %v644 = vadd.f32 0.0, %v643
    %v645 = vpop.f32.mrb[0].mxu0
    %646 = vdwg.mxu0
    %v648 = vsel %vm477, %v558, 0
    %v651 = vsel %vm477, %v559, 0
    %653 = vmatprep.subr.mxu0 0.0
    %654 = vmatpush1.msra.mxu0 %v340
    %655 = vmatprep.subr.mxu0 0.0
    %656 = vmatpush1.msra.mxu0 %v341
    %657 = vmatprep.subr.mxu0 0.0
    %658 = vmatpush1.msra.mxu0 0.0
    %659 = vmatprep.subr.mxu0 0.0
    %660 = vmatpush1.msra.mxu0 0.0
    %661 = vmatprep.subr.mxu0 0.0
    %662 = vmatpush1.msra.mxu0 0.0
    %663 = vmatprep.subr.mxu0 0.0
    %664 = vmatpush1.msra.mxu0 0.0
    %665 = vmatprep.subr.mxu0 0.0
    %666 = vmatpush1.msra.mxu0 0.0
    %667 = vmatprep.subr.mxu0 0.0
    %668 = vmatpush1.msra.mxu0 0.0
    %669 = vmatprep.subr.mxu0 0.0
    %670 = vmatpush1.msra.mxu0 0.0
    %671 = vmatprep.subr.mxu0 0.0
    %672 = vmatpush1.msra.mxu0 0.0
    %673 = vmatprep.subr.mxu0 0.0
    %674 = vmatpush1.msra.mxu0 0.0
    %675 = vmatprep.subr.mxu0 0.0
    %676 = vmatpush1.msra.mxu0 0.0
    %677 = vmatprep.subr.mxu0 0.0
    %678 = vmatpush1.msra.mxu0 0.0
    %679 = vmatprep.subr.mxu0 0.0
    %680 = vmatpush1.msra.mxu0 0.0
    %681 = vmatprep.subr.mxu0 0.0
    %682 = vmatpush1.msra.mxu0 0.0
    %683 = vmatprep.subr.mxu0 0.0
    %684 = vmatpush1.msra.mxu0 0.0
    %685 = vmatprep.subr.mxu0 0.0
    %686 = vmatpush1.msra.mxu0 0.0
    %687 = vmatprep.subr.mxu0 0.0
    %688 = vmatpush1.msra.mxu0 0.0
    %689 = vmatprep.subr.mxu0 0.0
    %690 = vmatpush1.msra.mxu0 0.0
    %691 = vmatprep.subr.mxu0 0.0
    %692 = vmatpush1.msra.mxu0 0.0
    %693 = vmatprep.subr.mxu0 0.0
    %694 = vmatpush1.msra.mxu0 0.0
    %695 = vmatprep.subr.mxu0 0.0
    %696 = vmatpush1.msra.mxu0 0.0
    %697 = vmatprep.subr.mxu0 0.0
    %698 = vmatpush1.msra.mxu0 0.0
    %699 = vmatprep.subr.mxu0 0.0
    %700 = vmatpush1.msra.mxu0 0.0
    %701 = vmatprep.subr.mxu0 0.0
    %702 = vmatpush1.msra.mxu0 0.0
    %703 = vmatprep.subr.mxu0 0.0
    %704 = vmatpush1.msra.mxu0 0.0
    %705 = vmatprep.subr.mxu0 0.0
    %706 = vmatpush1.msra.mxu0 0.0
    %707 = vmatprep.subr.mxu0 0.0
    %708 = vmatpush1.msra.mxu0 0.0
    %709 = vmatprep.subr.mxu0 0.0
    %710 = vmatpush1.msra.mxu0 0.0
    %711 = vmatprep.subr.mxu0 0.0
    %712 = vmatpush1.msra.mxu0 0.0
    %713 = vmatprep.subr.mxu0 0.0
    %714 = vmatpush1.msra.mxu0 0.0
    %715 = vmatprep.subr.mxu0 0.0
    %716 = vmatpush1.msra.mxu0 0.0
    %717 = vmatprep.mubr.f32.mxu0 0.0
    %718 = vmatmul.mubr.f32.gmra.mrb[0].mxu0 %v648
    %v719 = vpop.f32.mrb[0].mxu0
    %v720 = vadd.f32 %v639, %v719
    %v721 = vpop.f32.mrb[0].mxu0
    %722 = vmatprep.mubr.f32.mxu0 0.0
    %723 = vmatmul.mubr.f32.gmra.mrb[0].mxu0 %v651
    %v724 = vpop.f32.mrb[0].mxu0
    %v725 = vadd.f32 %v644, %v724
    %v726 = vpop.f32.mrb[0].mxu0
    %727 = vdwg.mxu0
    %v729 = vsel %vm477, %v562, 0
    %v732 = vsel %vm477, %v563, 0
    %734 = vmatprep.subr.mxu0 0.0
    %735 = vmatpush1.msra.mxu0 %v344
    %736 = vmatprep.subr.mxu0 0.0
    %737 = vmatpush1.msra.mxu0 %v345
    %738 = vmatprep.subr.mxu0 0.0
    %739 = vmatpush1.msra.mxu0 0.0
    %740 = vmatprep.subr.mxu0 0.0
    %741 = vmatpush1.msra.mxu0 0.0
    %742 = vmatprep.subr.mxu0 0.0
    %743 = vmatpush1.msra.mxu0 0.0
    %744 = vmatprep.subr.mxu0 0.0
    %745 = vmatpush1.msra.mxu0 0.0
    %746 = vmatprep.subr.mxu0 0.0
    %747 = vmatpush1.msra.mxu0 0.0
    %748 = vmatprep.subr.mxu0 0.0
    %749 = vmatpush1.msra.mxu0 0.0
    %750 = vmatprep.subr.mxu0 0.0
    %751 = vmatpush1.msra.mxu0 0.0
    %752 = vmatprep.subr.mxu0 0.0
    %753 = vmatpush1.msra.mxu0 0.0
    %754 = vmatprep.subr.mxu0 0.0
    %755 = vmatpush1.msra.mxu0 0.0
    %756 = vmatprep.subr.mxu0 0.0
    %757 = vmatpush1.msra.mxu0 0.0
    %758 = vmatprep.subr.mxu0 0.0
    %759 = vmatpush1.msra.mxu0 0.0
    %760 = vmatprep.subr.mxu0 0.0
    %761 = vmatpush1.msra.mxu0 0.0
    %762 = vmatprep.subr.mxu0 0.0
    %763 = vmatpush1.msra.mxu0 0.0
    %764 = vmatprep.subr.mxu0 0.0
    %765 = vmatpush1.msra.mxu0 0.0
    %766 = vmatprep.subr.mxu0 0.0
    %767 = vmatpush1.msra.mxu0 0.0
    %768 = vmatprep.subr.mxu0 0.0
    %769 = vmatpush1.msra.mxu0 0.0
    %770 = vmatprep.subr.mxu0 0.0
    %771 = vmatpush1.msra.mxu0 0.0
    %772 = vmatprep.subr.mxu0 0.0
    %773 = vmatpush1.msra.mxu0 0.0
    %774 = vmatprep.subr.mxu0 0.0
    %775 = vmatpush1.msra.mxu0 0.0
    %776 = vmatprep.subr.mxu0 0.0
    %777 = vmatpush1.msra.mxu0 0.0
    %778 = vmatprep.subr.mxu0 0.0
    %779 = vmatpush1.msra.mxu0 0.0
    %780 = vmatprep.subr.mxu0 0.0
    %781 = vmatpush1.msra.mxu0 0.0
    %782 = vmatprep.subr.mxu0 0.0
    %783 = vmatpush1.msra.mxu0 0.0
    %784 = vmatprep.subr.mxu0 0.0
    %785 = vmatpush1.msra.mxu0 0.0
    %786 = vmatprep.subr.mxu0 0.0
    %787 = vmatpush1.msra.mxu0 0.0
    %788 = vmatprep.subr.mxu0 0.0
    %789 = vmatpush1.msra.mxu0 0.0
    %790 = vmatprep.subr.mxu0 0.0
    %791 = vmatpush1.msra.mxu0 0.0
    %792 = vmatprep.subr.mxu0 0.0
    %793 = vmatpush1.msra.mxu0 0.0
    %794 = vmatprep.subr.mxu0 0.0
    %795 = vmatpush1.msra.mxu0 0.0
    %796 = vmatprep.subr.mxu0 0.0
    %797 = vmatpush1.msra.mxu0 0.0
    %798 = vmatprep.mubr.f32.mxu0 0.0
    %799 = vmatmul.mubr.f32.gmra.mrb[0].mxu0 %v729
    %v800 = vpop.f32.mrb[0].mxu0
    %v801 = vadd.f32 0.0, %v800
    %v802 = vpop.f32.mrb[0].mxu0
    %803 = vmatprep.mubr.f32.mxu0 0.0
    %804 = vmatmul.mubr.f32.gmra.mrb[0].mxu0 %v732
    %v805 = vpop.f32.mrb[0].mxu0
    %v806 = vadd.f32 0.0, %v805
    %v807 = vpop.f32.mrb[0].mxu0
    %808 = vdwg.mxu0
    %v809 = vadd.f32 %v720, %v801
    %v810 = vadd.f32 %v725, %v806
    %v812 = vsel %vm477, %v564, 0
    %v815 = vsel %vm477, %v565, 0
    %817 = vmatprep.subr.mxu0 0.0
    %818 = vmatpush1.msra.mxu0 %v346
    %819 = vmatprep.subr.mxu0 0.0
    %820 = vmatpush1.msra.mxu0 %v347
    %821 = vmatprep.subr.mxu0 0.0
    %822 = vmatpush1.msra.mxu0 0.0
    %823 = vmatprep.subr.mxu0 0.0
    %824 = vmatpush1.msra.mxu0 0.0
    %825 = vmatprep.subr.mxu0 0.0
    %826 = vmatpush1.msra.mxu0 0.0
    %827 = vmatprep.subr.mxu0 0.0
    %828 = vmatpush1.msra.mxu0 0.0
    %829 = vmatprep.subr.mxu0 0.0
    %830 = vmatpush1.msra.mxu0 0.0
    %831 = vmatprep.subr.mxu0 0.0
    %832 = vmatpush1.msra.mxu0 0.0
    %833 = vmatprep.subr.mxu0 0.0
    %834 = vmatpush1.msra.mxu0 0.0
    %835 = vmatprep.subr.mxu0 0.0
    %836 = vmatpush1.msra.mxu0 0.0
    %837 = vmatprep.subr.mxu0 0.0
    %838 = vmatpush1.msra.mxu0 0.0
    %839 = vmatprep.subr.mxu0 0.0
    %840 = vmatpush1.msra.mxu0 0.0
    %841 = vmatprep.subr.mxu0 0.0
    %842 = vmatpush1.msra.mxu0 0.0
    %843 = vmatprep.subr.mxu0 0.0
    %844 = vmatpush1.msra.mxu0 0.0
    %845 = vmatprep.subr.mxu0 0.0
    %846 = vmatpush1.msra.mxu0 0.0
    %847 = vmatprep.subr.mxu0 0.0
    %848 = vmatpush1.msra.mxu0 0.0
    %849 = vmatprep.subr.mxu0 0.0
    %850 = vmatpush1.msra.mxu0 0.0
    %851 = vmatprep.subr.mxu0 0.0
    %852 = vmatpush1.msra.mxu0 0.0
    %853 = vmatprep.subr.mxu0 0.0
    %854 = vmatpush1.msra.mxu0 0.0
    %855 = vmatprep.subr.mxu0 0.0
    %856 = vmatpush1.msra.mxu0 0.0
    %857 = vmatprep.subr.mxu0 0.0
    %858 = vmatpush1.msra.mxu0 0.0
    %859 = vmatprep.subr.mxu0 0.0
    %860 = vmatpush1.msra.mxu0 0.0
    %861 = vmatprep.subr.mxu0 0.0
    %862 = vmatpush1.msra.mxu0 0.0
    %863 = vmatprep.subr.mxu0 0.0
    %864 = vmatpush1.msra.mxu0 0.0
    %865 = vmatprep.subr.mxu0 0.0
    %866 = vmatpush1.msra.mxu0 0.0
    %867 = vmatprep.subr.mxu0 0.0
    %868 = vmatpush1.msra.mxu0 0.0
    %869 = vmatprep.subr.mxu0 0.0
    %870 = vmatpush1.msra.mxu0 0.0
    %871 = vmatprep.subr.mxu0 0.0
    %872 = vmatpush1.msra.mxu0 0.0
    %873 = vmatprep.subr.mxu0 0.0
    %874 = vmatpush1.msra.mxu0 0.0
    %875 = vmatprep.subr.mxu0 0.0
    %876 = vmatpush1.msra.mxu0 0.0
    %877 = vmatprep.subr.mxu0 0.0
    %878 = vmatpush1.msra.mxu0 0.0
    %879 = vmatprep.subr.mxu0 0.0
    %880 = vmatpush1.msra.mxu0 0.0
    %881 = vmatprep.mubr.f32.mxu0 0.0
    %882 = vmatmul.mubr.f32.gmra.mrb[0].mxu0 %v812
    %v883 = vpop.f32.mrb[0].mxu0
    %v884 = vadd.f32 0.0, %v883
    %v885 = vpop.f32.mrb[0].mxu0
    %886 = vmatprep.mubr.f32.mxu0 0.0
    %887 = vmatmul.mubr.f32.gmra.mrb[0].mxu0 %v815
    %v888 = vpop.f32.mrb[0].mxu0
    %v889 = vadd.f32 0.0, %v888
    %v890 = vpop.f32.mrb[0].mxu0
    %891 = vdwg.mxu0
    %v892 = vadd.f32 %v809, %v884
    %v893 = vadd.f32 %v810, %v889
    %v894 = vld [vmem:[#allocation2] sm:$0xff]
    %v895 = vld [vmem:[#allocation2 + $0x8] sm:$0xff]
    %v896 = vld [vmem:[#allocation2 + $0x10] sm:$0xff]
    %v897 = vld [vmem:[#allocation2 + $0x18] sm:$0xff]
    %v898 = vld [vmem:[#allocation2 + $0x20] sm:$0xff]
    %v899 = vld [vmem:[#allocation2 + $0x28] sm:$0xff]
    %v900 = vld [vmem:[#allocation2 + $0x30] sm:$0xff]
    %v901 = vld [vmem:[#allocation2 + $0x38] sm:$0xff]
    %v902 = vld [vmem:[#allocation2 + $0x40] sm:$0xff]
    %v903 = vld [vmem:[#allocation2 + $0x48] sm:$0xff]
    %v904 = vld [vmem:[#allocation2 + $0x50] sm:$0xff]
    %v905 = vld [vmem:[#allocation2 + $0x58] sm:$0xff]
    %v906 = vld [vmem:[#allocation2 + $0x60] sm:$0xff]
    %v907 = vld [vmem:[#allocation2 + $0x68] sm:$0xff]
    %v908 = vld [vmem:[#allocation2 + $0x70] sm:$0xff]
    %v909 = vld [vmem:[#allocation2 + $0x78] sm:$0xff]
    %v910 = vld [vmem:[%s4] sm:$0x1]
    %v912 = vlaneseq
    %v913 = vshrl.u32 %v912, 7
    %v914 = vsub.s32 0, %v913
    %v915 = vrot.slane %v910, %v914
    %917 = vmatprep.subr.mxu0 0.0
    %918 = vmatpush1.msra.mxu0 %v894
    %919 = vmatprep.subr.mxu0 0.0
    %920 = vmatpush1.msra.mxu0 %v895
    %921 = vmatprep.subr.mxu0 0.0
    %922 = vmatpush1.msra.mxu0 %v896
    %923 = vmatprep.subr.mxu0 0.0
    %924 = vmatpush1.msra.mxu0 %v897
    %925 = vmatprep.subr.mxu0 0.0
    %926 = vmatpush1.msra.mxu0 %v898
    %927 = vmatprep.subr.mxu0 0.0
    %928 = vmatpush1.msra.mxu0 %v899
    %929 = vmatprep.subr.mxu0 0.0
    %930 = vmatpush1.msra.mxu0 %v900
    %931 = vmatprep.subr.mxu0 0.0
    %932 = vmatpush1.msra.mxu0 %v901
    %933 = vmatprep.subr.mxu0 0.0
    %934 = vmatpush1.msra.mxu0 %v902
    %935 = vmatprep.subr.mxu0 0.0
    %936 = vmatpush1.msra.mxu0 %v903
    %937 = vmatprep.subr.mxu0 0.0
    %938 = vmatpush1.msra.mxu0 %v904
    %939 = vmatprep.subr.mxu0 0.0
    %940 = vmatpush1.msra.mxu0 %v905
    %941 = vmatprep.subr.mxu0 0.0
    %942 = vmatpush1.msra.mxu0 %v906
    %943 = vmatprep.subr.mxu0 0.0
    %944 = vmatpush1.msra.mxu0 %v907
    %945 = vmatprep.subr.mxu0 0.0
    %946 = vmatpush1.msra.mxu0 %v908
    %947 = vmatprep.subr.mxu0 0.0
    %948 = vmatpush1.msra.mxu0 %v909
    %949 = vmatprep.subr.mxu0 0.0
    %950 = vmatpush1.msra.mxu0 0.0
    %951 = vmatprep.subr.mxu0 0.0
    %952 = vmatpush1.msra.mxu0 0.0
    %953 = vmatprep.subr.mxu0 0.0
    %954 = vmatpush1.msra.mxu0 0.0
    %955 = vmatprep.subr.mxu0 0.0
    %956 = vmatpush1.msra.mxu0 0.0
    %957 = vmatprep.subr.mxu0 0.0
    %958 = vmatpush1.msra.mxu0 0.0
    %959 = vmatprep.subr.mxu0 0.0
    %960 = vmatpush1.msra.mxu0 0.0
    %961 = vmatprep.subr.mxu0 0.0
    %962 = vmatpush1.msra.mxu0 0.0
    %963 = vmatprep.subr.mxu0 0.0
    %964 = vmatpush1.msra.mxu0 0.0
    %965 = vmatprep.subr.mxu0 0.0
    %966 = vmatpush1.msra.mxu0 0.0
    %967 = vmatprep.subr.mxu0 0.0
    %968 = vmatpush1.msra.mxu0 0.0
    %969 = vmatprep.subr.mxu0 0.0
    %970 = vmatpush1.msra.mxu0 0.0
    %971 = vmatprep.subr.mxu0 0.0
    %972 = vmatpush1.msra.mxu0 0.0
    %973 = vmatprep.subr.mxu0 0.0
    %974 = vmatpush1.msra.mxu0 0.0
    %975 = vmatprep.subr.mxu0 0.0
    %976 = vmatpush1.msra.mxu0 0.0
    %977 = vmatprep.subr.mxu0 0.0
    %978 = vmatpush1.msra.mxu0 0.0
    %979 = vmatprep.subr.mxu0 0.0
    %980 = vmatpush1.msra.mxu0 0.0
    %981 = vmatprep.mubr.f32.mxu0 0.0
    %982 = vmatmul.mubr.f32.gmra.mrb[0].mxu0 %v892
    %v983 = vpop.f32.mrb[0].mxu0
    %v984 = vadd.f32 %v915, %v983
    %v985 = vpop.f32.mrb[0].mxu0
    %986 = vmatprep.mubr.f32.mxu0 0.0
    %987 = vmatmul.mubr.f32.gmra.mrb[0].mxu0 %v893
    %v988 = vpop.f32.mrb[0].mxu0
    %v989 = vadd.f32 %v915, %v988
    %v990 = vpop.f32.mrb[0].mxu0
    %991 = vdwg.mxu0
    %992 = vst [vmem:[%s7] sm:$0xff] %v984
    %993 = vst [vmem:[%s7 + $0x8] sm:$0xff] %v989
    // Predicated region
    $region38: #{bigram_forward.1} parent=1 // pred_check
      _
    $region39: #{bigram_forward.1} parent=1 // pred_check_branch
      %995 = sbr.rel (0) target = $region41
    $region40: #{bigram_forward.1} parent=1 // pred_region
      _
    $region41: #{bigram_forward.1} parent=1 // pred_fallthru
      _
    // Predicated region
    $region42: #{bigram_forward.1} parent=1 // pred_check
      _
    $region43: #{bigram_forward.1} parent=1 // pred_check_branch
      %997 = sbr.rel (0) target = $region45
    $region44: #{bigram_forward.1} parent=1 // pred_region
      _
    $region45: #{bigram_forward.1} parent=1 // pred_fallthru
      _
    %998 = vsyncpa [#allocation3], 1
    %999 = vsyncpa [#allocation5], 1

</llo_original>
